<compile_context>
chip_gen: v7x
topology: tpu7x:2x2x1
jax: 0.10.0
libtpu: 0.0.40
codegen_flags: <defaults>
</compile_context>

<pallas_src>
import functools

import jax
import jax.numpy as jnp
from jax.experimental import pallas as pl
from jax.experimental.pallas import tpu as pltpu


def _round_up(x, m):
    return ((x + m - 1) // m) * m


@functools.lru_cache(maxsize=None)
def _vmem_capacity_bytes():
    # Trace-time HW query; fall back to the most conservative (v7x) capacity.
    try:
        return int(pltpu.get_tpu_info().vmem_capacity_bytes)
    except Exception:  # pragma: no cover - defensive fallback
        return 64 * 1024 * 1024


# ---------------- Pallas kernel: patch-embedding matmul (+bias) ----------------
def patch_embed_kernel(a_ref, w_ref, b_ref, o_ref):
    # a_ref: (tm, K)  bf16  unfolded-patch tile
    # w_ref: (K, Op)  bf16  flattened conv weight (O lane-padded to 128)
    # b_ref: (1, Op)  f32   lane-padded bias
    # o_ref: (tm, Op) bf16
    acc = jnp.dot(a_ref[...], w_ref[...], preferred_element_type=jnp.float32)
    o_ref[...] = (acc + b_ref[...]).astype(o_ref.dtype)


def _pick_tm(M, max_tm):
    """M tile: >= ~16 grid steps when M is big (>= 8 per TC on v7x), clamped to
    [256, max_tm], multiple of 8, preferring a divisor of M (no padded rows)."""
    m8 = _round_up(M, 8)
    tm = _round_up(pl.cdiv(M, 16), 8)
    tm = max(256, min(max_tm, tm))
    tm = min(tm, m8)
    if m8 % tm != 0:
        for cand in range(tm, max(tm // 2, 8) - 1, -8):
            if m8 % cand == 0:
                return cand
    return tm


def patch_embed_pallas(patches_mat, w_flat_p, bias_p, out_dim,
                       *, out_dtype=jnp.bfloat16):
    """patches_mat: (M, K) bf16; w_flat_p: (K, Op) bf16; bias_p: (1, Op) f32.

    Returns (M, out_dim) out_dtype (bf16 by default).
    """
    M, K = patches_mat.shape
    Kw, Op = w_flat_p.shape
    assert Kw == K

    vmem_cap = _vmem_capacity_bytes()
    max_tm = 1024 if vmem_cap >= 128 * 1024 * 1024 else 512   # v5e/v6e vs v7x
    vmem_limit = min(64 * 1024 * 1024, vmem_cap // 2)

    tm = _pick_tm(M, max_tm)
    Mp = _round_up(M, tm)

    a = patches_mat
    if Mp != M:
        # Padded rows only produce bias and are sliced off below.
        a = jnp.pad(a, ((0, Mp - M), (0, 0)))

    out_bytes = jnp.dtype(out_dtype).itemsize
    cost = pl.CostEstimate(
        flops=2 * Mp * K * Op,
        transcendentals=0,
        bytes_accessed=Mp * K * 2 + K * Op * 2 + Op * 4 + Mp * Op * out_bytes,
    )

    # NOTE: the weight/bias blocks are grid-invariant; single-buffering them
    # (pipeline_mode=pl.Buffered(1)) would save a copy of their VMEM footprint,
    # but is left at the default here — negligible at these weight sizes.
    out = pl.pallas_call(
        patch_embed_kernel,
        out_shape=jax.ShapeDtypeStruct((Mp, Op), out_dtype),
        grid_spec=pltpu.PrefetchScalarGridSpec(
            num_scalar_prefetch=0,
            grid=(Mp // tm,),
            in_specs=[
                pl.BlockSpec((tm, K), lambda i: (i, 0)),   # activation tile
                pl.BlockSpec((K, Op), lambda i: (0, 0)),   # broadcast weight
                pl.BlockSpec((1, Op), lambda i: (0, 0)),   # broadcast bias
            ],
            out_specs=pl.BlockSpec((tm, Op), lambda i: (i, 0)),
        ),
        compiler_params=pltpu.CompilerParams(
            dimension_semantics=("parallel",),   # shards M over TCs on v7x
            vmem_limit_bytes=vmem_limit,
        ),
        cost_estimate=cost,
    )(a, w_flat_p, bias_p)

    # No-op when tm | M and out_dim is already a multiple of 128 (real ViT dims).
    return out[:M, :out_dim]


# ---------------- weight preparation (done once, outside the forward) ----------
def prepare_patch_embed_params(conv_weight, conv_bias):
    """conv_weight: (O, C, P, P) torch Conv2d layout -> ((K, Op) bf16, (1, Op) f32).

    Only O is lane-padded to 128 (lane-dense output stores); K is left as-is.
    """
    O = conv_weight.shape[0]
    Op = _round_up(O, 128)
    # Flatten in PyTorch's (c, i, j) order, transpose to (K, O), lane-pad O, bf16.
    w_flat = conv_weight.reshape(O, -1).T
    w_flat_p = jnp.pad(w_flat.astype(jnp.bfloat16), ((0, 0), (0, Op - O)))
    bias_p = jnp.pad(conv_bias.astype(jnp.float32), (0, Op - O)).reshape(1, Op)
    return w_flat_p, bias_p


# ---------------- wrapper: MAE.forward (truncated source) ----------------------
def unfold_patches(x_nchw, patch_size, dtype=None):
    """(B, C, H, W) -> (B, num_patches, C*P*P), feature order (c, i, j).

    The optional dtype cast is applied right after the transpose so XLA fuses it
    into the unfold (single HBM pass, half the writeback bytes for bf16).
    """
    # TODO(synk): at ViT scale this NCHW unfold is a separate HBM pass; fuse it
    # into the kernel's input DMA (allow_input_fusion) or accept NHWC input.
    B, C, H, W = x_nchw.shape
    P = patch_size
    assert H % P == 0 and W % P == 0, "spatial dims must be divisible by patch_size"
    Hp, Wp = H // P, W // P
    x = x_nchw.reshape(B, C, Hp, P, Wp, P)
    x = jnp.transpose(x, (0, 2, 4, 1, 3, 5))       # (B, Hp, Wp, C, P, P)
    if dtype is not None:
        x = x.astype(dtype)
    return x.reshape(B, Hp * Wp, C * P * P)


@functools.partial(jax.jit, static_argnames=("patch_size", "hidden_size"))
def mae_forward(x_nchw, w_flat_p, bias_p, *, patch_size, hidden_size):
    """Implements the (truncated) MAE.forward: the ViT patch embedding."""
    B = x_nchw.shape[0]
    patches_feat = unfold_patches(x_nchw, patch_size, dtype=jnp.bfloat16)  # (B,N,K)
    _, N, K = patches_feat.shape
    out = patch_embed_pallas(
        patches_feat.reshape(B * N, K), w_flat_p, bias_p, hidden_size)
    patches = out.reshape(B, N, hidden_size)       # (B, num_patches, hidden)
    batch, num_patches = patches.shape[:2]
    # TODO(synk): masking / decoder / projection are cut off in the source.
    return patches


if __name__ == "__main__":
    # Config implied by gen_config defaults (encoder side):
    #   image_size=32, patch_size=4, num_channels=3, hidden_size=48
    image_size = 32
    patch_size = 4
    num_channels = 3
    hidden_size = 48
    batch = 2

    key = jax.random.PRNGKey(0)
    kx, kw, kb = jax.random.split(key, 3)

    x = jax.random.normal(kx, (batch, num_channels, image_size, image_size),
                          dtype=jnp.float32)
    # Conv2d(num_channels, hidden_size, kernel_size=patch_size, stride=patch_size)
    conv_weight = (jax.random.normal(
        kw, (hidden_size, num_channels, patch_size, patch_size),
        dtype=jnp.float32) * 0.02)
    conv_bias = jax.random.normal(kb, (hidden_size,), dtype=jnp.float32) * 0.02

    # Precompute (O-padded, bf16) kernel params once — not per forward call.
    w_flat_p, bias_p = prepare_patch_embed_params(conv_weight, conv_bias)

    patches = mae_forward(x, w_flat_p, bias_p,
                          patch_size=patch_size, hidden_size=hidden_size)
    patches = jax.block_until_ready(patches)

    # Sanity check vs. plain-JAX f32 reference (strided conv == unfold + matmul).
    # Tolerance loosened because the kernel runs bf16 operands / bf16 output
    # (f32 MXU accumulation) — an intentional precision/bandwidth trade.
    ref = jnp.einsum("bnk,ko->bno",
                     unfold_patches(x, patch_size),
                     conv_weight.reshape(hidden_size, -1).T) + conv_bias
    assert patches.shape == (batch, (image_size // patch_size) ** 2, hidden_size)
    err = float(jnp.max(jnp.abs(patches.astype(jnp.float32) - ref)))
    assert err < 5e-2, err

    print("KERNEL_OK")
</pallas_src>

<mosaic_0001>
module attributes {stable_mosaic.version = 11 : i64} {
  func.func @patch_embed_kernel(%arg0: i32, %arg1: memref<128x48xbf16, #tpu.memory_space<vmem>>, %arg2: memref<48x128xbf16, #tpu.memory_space<vmem>>, %arg3: memref<1x128xf32, #tpu.memory_space<vmem>>, %arg4: memref<128x128xbf16, #tpu.memory_space<vmem>>) attributes {dimension_semantics = [#tpu.dimension_semantics<parallel>], iteration_bounds = array<i64: 1>, scalar_prefetch = 0 : i64, scratch_operands = 0 : i64, tpu.core_type = #tpu.core_type<tc>, window_params = [{transform_indices = @transform_0, window_bounds = array<i64: 128, 48>}, {pipeline_mode = #tpu.pipeline_mode<synchronous>, transform_indices = @transform_1, window_bounds = array<i64: 48, 128>}, {pipeline_mode = #tpu.pipeline_mode<synchronous>, transform_indices = @transform_2, window_bounds = array<i64: 1, 128>}, {transform_indices = @transform_3, window_bounds = array<i64: 128, 128>}]} {
    %c0 = arith.constant 0 : index
    %c0_0 = arith.constant 0 : index
    %0 = vector.load %arg1[%c0, %c0_0] : memref<128x48xbf16, #tpu.memory_space<vmem>>, vector<128x48xbf16>
    %c0_1 = arith.constant 0 : index
    %c0_2 = arith.constant 0 : index
    %1 = vector.load %arg2[%c0_1, %c0_2] : memref<48x128xbf16, #tpu.memory_space<vmem>>, vector<48x128xbf16>
    %cst = arith.constant dense<0.000000e+00> : vector<128x128xf32>
    %2 = tpu.matmul %0, %1, %cst {dimension_numbers = #tpu.dot_dimension_numbers<[1], [0], [0], [1], [0, 0, 1, 1], [], []>} : vector<128x48xbf16>, vector<48x128xbf16>, vector<128x128xf32> -> vector<128x128xf32>
    %c0_3 = arith.constant 0 : index
    %c0_4 = arith.constant 0 : index
    %3 = vector.load %arg3[%c0_3, %c0_4] : memref<1x128xf32, #tpu.memory_space<vmem>>, vector<1x128xf32>
    %4 = vector.broadcast %3 : vector<1x128xf32> to vector<128x128xf32>
    %5 = arith.addf %2, %4 : vector<128x128xf32>
    %6 = arith.truncf %5 : vector<128x128xf32> to vector<128x128xbf16>
    %c0_5 = arith.constant 0 : index
    %c0_6 = arith.constant 0 : index
    %7 = vector.load %arg4[%c0_5, %c0_6] : memref<128x128xbf16, #tpu.memory_space<vmem>>, vector<128x128xbf16>
    tpu.vector_store %arg4[%c0_5, %c0_6], %6 {strides = array<i32>} : memref<128x128xbf16, #tpu.memory_space<vmem>>, vector<128x128xbf16>,
    return
  }
  func.func @transform_0(%arg0: i32) -> (i32, i32) {
    %c0_i32 = arith.constant 0 : i32
    %c0_i32_0 = arith.constant 0 : i32
    return %arg0, %c0_i32 : i32, i32
  }
  func.func @transform_1(%arg0: i32) -> (i32, i32) {
    %c0_i32 = arith.constant 0 : i32
    %c0_i32_0 = arith.constant 0 : i32
    %c0_i32_1 = arith.constant 0 : i32
    return %c0_i32, %c0_i32_0 : i32, i32
  }
  func.func @transform_2(%arg0: i32) -> (i32, i32) {
    %c0_i32 = arith.constant 0 : i32
    %c0_i32_0 = arith.constant 0 : i32
    %c0_i32_1 = arith.constant 0 : i32
    return %c0_i32, %c0_i32_0 : i32, i32
  }
  func.func @transform_3(%arg0: i32) -> (i32, i32) {
    %c0_i32 = arith.constant 0 : i32
    %c0_i32_0 = arith.constant 0 : i32
    return %arg0, %c0_i32 : i32, i32
  }
}

</mosaic_0001>

<llo_original>
// kernel: mae_forward.1
$region0: #{mae_forward.1}
  #allocation0 [shape = 'u32[]', space=smem, size = 0x4, offset = 0x4, fixed_abs, tag = 'smem constant byte address 0x4 - core index']
  #allocation1 [shape = 'u32[144,128]{1,0:T(1,128)}', space=vmem, size = 0x12000, scoped, tag = 'internal scratch']
  %s0 = inlined_call_operand.vmem [shape: bf16[128,48], index: 0, kind: input, shape index: {}]
  %s1 = inlined_call_operand.vmem [shape: bf16[48,128], index: 1, kind: input, shape index: {}]
  %s2 = inlined_call_operand.vmem [shape: f32[1,128], index: 2, kind: input, shape index: {}]
  %s3 = inlined_call_operand.vmem [shape: bf16[128,128], index: 3, kind: output, shape index: {}]
  %s4 = sld [smem:[#allocation0]]
  $region22: #{mae_forward.1} parent=0
    _
  %s6 = ssub.s32 1, %s4
  %s7 = scalar_select 0, %s6, %s4
  // Predicated region
  $region2: #{mae_forward.1} parent=0 // pred_check
    _
  $region3: #{mae_forward.1} parent=0 // pred_check_branch
    %9 = sbr.rel (0) target = $region5
  $region4: #{mae_forward.1} parent=0 // pred_region
    _
  $region5: #{mae_forward.1} parent=0 // pred_fallthru
    _
  // Predicated region
  $region6: #{mae_forward.1} parent=0 // pred_check
    _
  $region7: #{mae_forward.1} parent=0 // pred_check_branch
    %11 = sbr.rel (0) target = $region9
  $region8: #{mae_forward.1} parent=0 // pred_region
    _
  $region9: #{mae_forward.1} parent=0 // pred_fallthru
    _
  // Predicated region
  $region10: #{mae_forward.1} parent=0 // pred_check
    _
  $region11: #{mae_forward.1} parent=0 // pred_check_branch
    %13 = sbr.rel (0) target = $region13
  $region12: #{mae_forward.1} parent=0 // pred_region
    _
  $region13: #{mae_forward.1} parent=0 // pred_fallthru
    _
  %v15 = vld [vmem:[%s0] sm:$0xf]
  %v16 = vld [vmem:[%s0 + $0x4] sm:$0xf]
  %v17 = vld [vmem:[%s0 + $0x8] sm:$0xf]
  %v18 = vld [vmem:[%s0 + $0xc] sm:$0xf]
  %v19 = vld [vmem:[%s0 + $0x10] sm:$0xf]
  %v20 = vld [vmem:[%s0 + $0x14] sm:$0xf]
  %v21 = vld [vmem:[%s0 + $0x18] sm:$0xf]
  %v22 = vld [vmem:[%s0 + $0x1c] sm:$0xf]
  %v23 = vld [vmem:[%s0 + $0x20] sm:$0xf]
  %v24 = vld [vmem:[%s0 + $0x24] sm:$0xf]
  %v25 = vld [vmem:[%s0 + $0x28] sm:$0xf]
  %v26 = vld [vmem:[%s0 + $0x2c] sm:$0xf]
  %v27 = vld [vmem:[%s0 + $0x30] sm:$0xf]
  %v28 = vld [vmem:[%s0 + $0x34] sm:$0xf]
  %v29 = vld [vmem:[%s0 + $0x38] sm:$0xf]
  %v30 = vld [vmem:[%s0 + $0x3c] sm:$0xf]
  %v31 = vld [vmem:[%s1] sm:$0xf]
  %v32 = vld [vmem:[%s1 + $0x4] sm:$0xf]
  %v33 = vld [vmem:[%s1 + $0x8] sm:$0xf]
  %v34 = vld [vmem:[%s1 + $0xc] sm:$0xf]
  %v35 = vld [vmem:[%s1 + $0x10] sm:$0xf]
  %v36 = vld [vmem:[%s1 + $0x14] sm:$0xf]
  %v37 = vld [vmem:[%s2] sm:$0x1]
  %v39 = vlaneseq
  %v40 = vshrl.u32 %v39, 7
  %v41 = vsub.s32 0, %v40
  %v42 = vrot.slane %v37, %v41
  %v60 = vunpack.c.l.b16 %v15
  %v61 = vunpack.c.l.b16 %v16
  %v62 = vunpack.c.l.b16 %v17
  %v63 = vunpack.c.l.b16 %v18
  %v64 = vunpack.c.l.b16 %v19
  %v65 = vunpack.c.l.b16 %v20
  %v66 = vunpack.c.l.b16 %v21
  %v67 = vunpack.c.l.b16 %v22
  %v68 = vunpack.c.l.b16 %v23
  %v69 = vunpack.c.l.b16 %v24
  %v70 = vunpack.c.l.b16 %v25
  %v71 = vunpack.c.l.b16 %v26
  %v72 = vunpack.c.l.b16 %v27
  %v73 = vunpack.c.l.b16 %v28
  %v74 = vunpack.c.l.b16 %v29
  %v75 = vunpack.c.l.b16 %v30
  %v76 = vpack.c.b16 %v61, %v60
  %v77 = vpack.c.b16 %v63, %v62
  %v78 = vpack.c.b16 %v65, %v64
  %v79 = vpack.c.b16 %v67, %v66
  %v80 = vpack.c.b16 %v69, %v68
  %v81 = vpack.c.b16 %v71, %v70
  %v82 = vpack.c.b16 %v73, %v72
  %v83 = vpack.c.b16 %v75, %v74
  %v90 = vunpack.c.l.b16 %v31
  %v91 = vunpack.c.l.b16 %v32
  %v92 = vunpack.c.l.b16 %v33
  %v93 = vunpack.c.l.b16 %v34
  %v94 = vunpack.c.l.b16 %v35
  %v95 = vunpack.c.l.b16 %v36
  %v96 = vpack.c.b16 %v91, %v90
  %v97 = vpack.c.b16 %v93, %v92
  %v98 = vpack.c.b16 %v95, %v94
  %vm102 = vcmask 392192
  %v104 = vsel %vm102, %v76, 0
  %v107 = vsel %vm102, %v77, 0
  %v110 = vsel %vm102, %v78, 0
  %v113 = vsel %vm102, %v79, 0
  %v116 = vsel %vm102, %v80, 0
  %v119 = vsel %vm102, %v81, 0
  %v122 = vsel %vm102, %v82, 0
  %v125 = vsel %vm102, %v83, 0
  %127 = vmatprep.subr.bf16.mxu0 0
  %128 = vmatpush1.bf16.msra.mxu0 %v96
  %129 = vmatprep.subr.bf16.mxu0 0
  %130 = vmatpush1.bf16.msra.mxu0 %v97
  %131 = vmatprep.subr.bf16.mxu0 0
  %132 = vmatpush1.bf16.msra.mxu0 %v98
  %133 = vmatprep.subr.bf16.mxu0 0
  %134 = vmatpush1.bf16.msra.mxu0 0
  %135 = vmatprep.subr.bf16.mxu0 0
  %136 = vmatpush1.bf16.msra.mxu0 0
  %137 = vmatprep.subr.bf16.mxu0 0
  %138 = vmatpush1.bf16.msra.mxu0 0
  %139 = vmatprep.subr.bf16.mxu0 0
  %140 = vmatpush1.bf16.msra.mxu0 0
  %141 = vmatprep.subr.bf16.mxu0 0
  %142 = vmatpush1.bf16.msra.mxu0 0
  %143 = vmatprep.subr.bf16.mxu0 0
  %144 = vmatpush1.bf16.msra.mxu0 0
  %145 = vmatprep.subr.bf16.mxu0 0
  %146 = vmatpush1.bf16.msra.mxu0 0
  %147 = vmatprep.subr.bf16.mxu0 0
  %148 = vmatpush1.bf16.msra.mxu0 0
  %149 = vmatprep.subr.bf16.mxu0 0
  %150 = vmatpush1.bf16.msra.mxu0 0
  %151 = vmatprep.subr.bf16.mxu0 0
  %152 = vmatpush1.bf16.msra.mxu0 0
  %153 = vmatprep.subr.bf16.mxu0 0
  %154 = vmatpush1.bf16.msra.mxu0 0
  %155 = vmatprep.subr.bf16.mxu0 0
  %156 = vmatpush1.bf16.msra.mxu0 0
  %157 = vmatprep.subr.bf16.mxu0 0
  %158 = vmatpush1.bf16.msra.mxu0 0
  %159 = vmatprep.mubr.bf16.mxu0 0
  %160 = vmatmul.mubr.bf16.gmra.mrb[0].mxu0 %v104
  %v161 = vpop.f32.mrb[0].mxu0
  %v162 = vadd.f32 %v42, %v161
  %v163 = vpop.f32.mrb[0].mxu0
  %v164 = vpop.f32.mrb[0].mxu0
  %v165 = vadd.f32 %v42, %v164
  %v166 = vpop.f32.mrb[0].mxu0
  %167 = vmatprep.mubr.bf16.mxu0 0
  %168 = vmatmul.mubr.bf16.gmra.mrb[0].mxu0 %v107
  %v169 = vpop.f32.mrb[0].mxu0
  %v170 = vadd.f32 %v42, %v169
  %v171 = vpop.f32.mrb[0].mxu0
  %v172 = vpop.f32.mrb[0].mxu0
  %v173 = vadd.f32 %v42, %v172
  %v174 = vpop.f32.mrb[0].mxu0
  %175 = vmatprep.mubr.bf16.mxu0 0
  %176 = vmatmul.mubr.bf16.gmra.mrb[0].mxu0 %v110
  %v177 = vpop.f32.mrb[0].mxu0
  %v178 = vadd.f32 %v42, %v177
  %v179 = vpop.f32.mrb[0].mxu0
  %v180 = vpop.f32.mrb[0].mxu0
  %v181 = vadd.f32 %v42, %v180
  %v182 = vpop.f32.mrb[0].mxu0
  %183 = vmatprep.mubr.bf16.mxu0 0
  %184 = vmatmul.mubr.bf16.gmra.mrb[0].mxu0 %v113
  %v185 = vpop.f32.mrb[0].mxu0
  %v186 = vadd.f32 %v42, %v185
  %v187 = vpop.f32.mrb[0].mxu0
  %v188 = vpop.f32.mrb[0].mxu0
  %v189 = vadd.f32 %v42, %v188
  %v190 = vpop.f32.mrb[0].mxu0
  %191 = vmatprep.mubr.bf16.mxu0 0
  %192 = vmatmul.mubr.bf16.gmra.mrb[0].mxu0 %v116
  %v193 = vpop.f32.mrb[0].mxu0
  %v194 = vadd.f32 %v42, %v193
  %v195 = vpop.f32.mrb[0].mxu0
  %v196 = vpop.f32.mrb[0].mxu0
  %v197 = vadd.f32 %v42, %v196
  %v198 = vpop.f32.mrb[0].mxu0
  %199 = vmatprep.mubr.bf16.mxu0 0
  %200 = vmatmul.mubr.bf16.gmra.mrb[0].mxu0 %v119
  %v201 = vpop.f32.mrb[0].mxu0
  %v202 = vadd.f32 %v42, %v201
  %v203 = vpop.f32.mrb[0].mxu0
  %v204 = vpop.f32.mrb[0].mxu0
  %v205 = vadd.f32 %v42, %v204
  %v206 = vpop.f32.mrb[0].mxu0
  %207 = vmatprep.mubr.bf16.mxu0 0
  %208 = vmatmul.mubr.bf16.gmra.mrb[0].mxu0 %v122
  %v209 = vpop.f32.mrb[0].mxu0
  %v210 = vadd.f32 %v42, %v209
  %v211 = vpop.f32.mrb[0].mxu0
  %v212 = vpop.f32.mrb[0].mxu0
  %v213 = vadd.f32 %v42, %v212
  %v214 = vpop.f32.mrb[0].mxu0
  %215 = vmatprep.mubr.bf16.mxu0 0
  %216 = vmatmul.mubr.bf16.gmra.mrb[0].mxu0 %v125
  %v217 = vpop.f32.mrb[0].mxu0
  %v218 = vadd.f32 %v42, %v217
  %v219 = vpop.f32.mrb[0].mxu0
  %v220 = vpop.f32.mrb[0].mxu0
  %v221 = vadd.f32 %v42, %v220
  %v222 = vpop.f32.mrb[0].mxu0
  %223 = vdwg.mxu0
  %v224 = vpack.c.bf16 %v165, %v162
  %v225 = vpack.c.bf16 %v173, %v170
  %v226 = vpack.c.bf16 %v181, %v178
  %v227 = vpack.c.bf16 %v189, %v186
  %v228 = vpack.c.bf16 %v197, %v194
  %v229 = vpack.c.bf16 %v205, %v202
  %v230 = vpack.c.bf16 %v213, %v210
  %v231 = vpack.c.bf16 %v221, %v218
  %v240 = vunpack.c.l.b16 %v224
  %v241 = vunpack.c.h.b16 %v224
  %v242 = vunpack.c.l.b16 %v225
  %v243 = vunpack.c.h.b16 %v225
  %v244 = vunpack.c.l.b16 %v226
  %v245 = vunpack.c.h.b16 %v226
  %v246 = vunpack.c.l.b16 %v227
  %v247 = vunpack.c.h.b16 %v227
  %v248 = vunpack.c.l.b16 %v228
  %v249 = vunpack.c.h.b16 %v228
  %v250 = vunpack.c.l.b16 %v229
  %v251 = vunpack.c.h.b16 %v229
  %v252 = vunpack.c.l.b16 %v230
  %v253 = vunpack.c.h.b16 %v230
  %v254 = vunpack.c.l.b16 %v231
  %v255 = vunpack.c.h.b16 %v231
  %v256 = vpack.c.b16 %v240, %v240
  %v257 = vpack.c.b16 %v241, %v241
  %v258 = vpack.c.b16 %v242, %v242
  %v259 = vpack.c.b16 %v243, %v243
  %v260 = vpack.c.b16 %v244, %v244
  %v261 = vpack.c.b16 %v245, %v245
  %v262 = vpack.c.b16 %v246, %v246
  %v263 = vpack.c.b16 %v247, %v247
  %v264 = vpack.c.b16 %v248, %v248
  %v265 = vpack.c.b16 %v249, %v249
  %v266 = vpack.c.b16 %v250, %v250
  %v267 = vpack.c.b16 %v251, %v251
  %v268 = vpack.c.b16 %v252, %v252
  %v269 = vpack.c.b16 %v253, %v253
  %v270 = vpack.c.b16 %v254, %v254
  %v271 = vpack.c.b16 %v255, %v255
  %288 = vst [vmem:[%s3] sm:$0xf] %v256
  %289 = vst [vmem:[%s3 + $0x4] sm:$0xf] %v257
  %290 = vst [vmem:[%s3 + $0x8] sm:$0xf] %v258
  %291 = vst [vmem:[%s3 + $0xc] sm:$0xf] %v259
  %292 = vst [vmem:[%s3 + $0x10] sm:$0xf] %v260
  %293 = vst [vmem:[%s3 + $0x14] sm:$0xf] %v261
  %294 = vst [vmem:[%s3 + $0x18] sm:$0xf] %v262
  %295 = vst [vmem:[%s3 + $0x1c] sm:$0xf] %v263
  %296 = vst [vmem:[%s3 + $0x20] sm:$0xf] %v264
  %297 = vst [vmem:[%s3 + $0x24] sm:$0xf] %v265
  %298 = vst [vmem:[%s3 + $0x28] sm:$0xf] %v266
  %299 = vst [vmem:[%s3 + $0x2c] sm:$0xf] %v267
  %300 = vst [vmem:[%s3 + $0x30] sm:$0xf] %v268
  %301 = vst [vmem:[%s3 + $0x34] sm:$0xf] %v269
  %302 = vst [vmem:[%s3 + $0x38] sm:$0xf] %v270
  %303 = vst [vmem:[%s3 + $0x3c] sm:$0xf] %v271
  // Predicated region
  $region14: #{mae_forward.1} parent=0 // pred_check
    _
  $region15: #{mae_forward.1} parent=0 // pred_check_branch
    %305 = sbr.rel (0) target = $region17
  $region16: #{mae_forward.1} parent=0 // pred_region
    _
  $region17: #{mae_forward.1} parent=0 // pred_fallthru
    _
  // Predicated region
  $region18: #{mae_forward.1} parent=0 // pred_check
    _
  $region19: #{mae_forward.1} parent=0 // pred_check_branch
    %307 = sbr.rel (0) target = $region21
  $region20: #{mae_forward.1} parent=0 // pred_region
    _
  $region21: #{mae_forward.1} parent=0 // pred_fallthru
    _

</llo_original>
